<compile_context>
chip_gen: v6e
topology: v6e:2x2x1
jax: 0.10.0
libtpu: 0.0.40
codegen_flags: <defaults>
</compile_context>

<pallas_src>
import jax
import jax.numpy as jnp
from jax.experimental import pallas as pl
from jax.experimental.pallas import tpu as pltpu


# ------------------------------- Pallas kernel ------------------------------ #

def _relpos_kernel(q_ref, rcat_t_ref, mask_ref, ecat_ref, o_ref):
    # q_ref     : (b, heads, tp, d)   queries in native layout (tp query positions)
    # rcat_t_ref: (d, C)              C = h*h + w*w relative slots: rows (x',i) then (y',j)
    # mask_ref  : (tp, C)             mask[p, c] = [x'==x(p)]  /  [y'==y(p)]   (0/1)
    # ecat_ref  : (C, n)              ecat[c, k] = [i ==i(k)]  /  [j ==j(k)]   (0/1)
    # o_ref     : (b, heads, tp, n)   written once, lane-dense along the key axis
    b, heads, tp, d = q_ref.shape
    n = o_ref.shape[-1]
    c = mask_ref.shape[-1]
    m = b * heads * tp

    q2 = q_ref[...].astype(jnp.float32).reshape(m, d)        # free merge (tp % 8 == 0)

    # (1) every relative-slot logit in one MXU matmul (lanes = C, dense).
    ql = jnp.dot(q2, rcat_t_ref[...], preferred_element_type=jnp.float32)      # (m, C)

    # (2) keep only the slots matching each row's (x, y): aligned dense VPU multiply.
    qlm = ql.reshape(b * heads, tp, c) * mask_ref[...][None, :, :]

    # (3) 0/1 expansion matmul: scatters slot (x',i)->(i,*) and (y',j)->(*,j) onto the
    #     lane-dense key axis k = i*w + j and sums the two contributions (idle MXU).
    out = jnp.dot(qlm.reshape(m, c), ecat_ref[...],
                  preferred_element_type=jnp.float32)                           # (m, n)

    o_ref[...] = out.reshape(b, heads, tp, n).astype(o_ref.dtype)


# --------------------------------- wrapper ---------------------------------- #

def _num_tensorcores():
    try:
        dev = jax.devices()[0]
        cores = getattr(dev, "num_cores", None)
        if cores is None:
            kind = str(getattr(dev, "device_kind", "")).lower()
            cores = 2 if "v7" in kind else 1       # v5e / v6e: single TensorCore
        return max(1, int(cores))
    except Exception:
        return 1


def rel_pos_emb_pallas(q, rel_height, rel_width, fmap_size, *,
                       q_block=None, out_dtype=None):
    """BoT RelPosEmb forward.  q: (b, heads, h*w, d) -> (b, heads, h*w, h*w)."""
    h, w = fmap_size
    b, heads, n, d = q.shape
    assert n == h * w, "sequence length must equal h*w"
    if out_dtype is None:
        out_dtype = q.dtype       # pass jnp.bfloat16 to halve HBM writeback (feedback #7)

    # Grid: 1 step on single-TC chips (v5e/v6e), 2 when two TensorCores are available.
    if q_block is None:
        steps = min(_num_tensorcores(), max(n // 8, 1))
        while steps > 1 and (n % steps != 0 or (n // steps) % 8 != 0):
            steps -= 1
        q_block = n // steps
    tp = int(q_block)
    assert n % tp == 0 and (tp % 8 == 0 or tp == n), "query block must be sublane aligned"
    steps = n // tp

    # Parameter-only glue: fold rel_to_abs / expand_dim into tiny 0/1 + gathered tables.
    f32 = jnp.float32
    cdim = h * h + w * w
    ih = jnp.arange(h)
    iw = jnp.arange(w)
    rh_flat = rel_height[(ih[None, :] - ih[:, None]) + (h - 1)].reshape(h * h, d)
    rw_flat = rel_width[(iw[None, :] - iw[:, None]) + (w - 1)].reshape(w * w, d)
    rcat_t = jnp.concatenate([rh_flat, rw_flat], axis=0).astype(f32).T          # (d, C)

    p = jnp.arange(n)
    xs, ys = p // w, p % w
    ch = jnp.arange(h * h)          # c = x'*h + i
    cw = jnp.arange(w * w)          # c = y'*w + j
    mask = jnp.concatenate(
        [(ch[None, :] // h) == xs[:, None],
         (cw[None, :] // w) == ys[:, None]], axis=1).astype(f32)                # (n, C)
    ecat = jnp.concatenate(
        [(ch[:, None] % h) == xs[None, :],
         (cw[:, None] % w) == ys[None, :]], axis=0).astype(f32)                 # (C, n)

    # VMEM budget (feedback #8): double-buffered blocks + in-kernel intermediates.
    out_bytes = jnp.dtype(out_dtype).itemsize
    blk = 4 * (b * heads * tp * d + tp * cdim + d * cdim + cdim * n) \
        + out_bytes * (b * heads * tp * n)
    interm = 8 * b * heads * tp * cdim
    vmem_limit = int(min(max(2 * blk + interm + (1 << 20), 32 << 20), 56 << 20))

    out = pl.pallas_call(
        _relpos_kernel,
        out_shape=jax.ShapeDtypeStruct((b, heads, n, n), out_dtype),
        grid_spec=pltpu.PrefetchScalarGridSpec(
            num_scalar_prefetch=0,
            grid=(steps,),
            in_specs=[
                pl.BlockSpec((b, heads, tp, d), lambda r: (0, 0, r, 0)),  # q (native)
                pl.BlockSpec((d, cdim), lambda r: (0, 0)),                # Rcat^T resident
                pl.BlockSpec((tp, cdim), lambda r: (r, 0)),               # per-row mask
                pl.BlockSpec((cdim, n), lambda r: (0, 0)),                # Ecat resident
            ],
            out_specs=pl.BlockSpec((b, heads, tp, n), lambda r: (0, 0, r, 0)),
        ),
        compiler_params=pltpu.CompilerParams(
            dimension_semantics=("parallel",),
            vmem_limit_bytes=vmem_limit,
        ),
    )(q, rcat_t, mask, ecat)
    return out


# ----------------------- pure-JAX reference (torch semantics) ---------------- #

def _rel_to_abs_ref(x):
    b, hh, l, _ = x.shape
    x = jnp.concatenate([x, jnp.zeros((b, hh, l, 1), x.dtype)], axis=3)
    flat_x = x.reshape(b, hh, l * 2 * l)
    flat_x = jnp.concatenate([flat_x, jnp.zeros((b, hh, l - 1), x.dtype)], axis=2)
    final_x = flat_x.reshape(b, hh, l + 1, 2 * l - 1)
    return final_x[:, :, :l, l - 1:]


def _relative_logits_1d_ref(q, rel_k):
    b, heads, h, w, d = q.shape
    logits = jnp.einsum('bhxyd,rd->bhxyr', q, rel_k,
                        precision=jax.lax.Precision.HIGHEST)
    logits = logits.reshape(b, heads * h, w, 2 * w - 1)
    logits = _rel_to_abs_ref(logits)
    logits = logits.reshape(b, heads, h, w, w)
    logits = jnp.broadcast_to(logits[:, :, :, None, :, :], (b, heads, h, h, w, w))
    return logits


def rel_pos_emb_ref(q, rel_height, rel_width, fmap_size):
    h, w = fmap_size
    b, heads, n, d = q.shape
    q5 = q.reshape(b, heads, h, w, d)
    lw = _relative_logits_1d_ref(q5, rel_width)               # (b, hd, x, i, y, j)
    lw = lw.transpose(0, 1, 2, 4, 3, 5).reshape(b, heads, h * w, h * w)
    q5t = q5.transpose(0, 1, 3, 2, 4)
    lh = _relative_logits_1d_ref(q5t, rel_height)             # (b, hd, y, i2, x, i)
    lh = lh.transpose(0, 1, 4, 2, 5, 3).reshape(b, heads, h * w, h * w)
    return lw + lh


# ----------------------------------- main ------------------------------------ #

if __name__ == "__main__":
    batch = 2
    heads = 4
    fmap = 8                       # h = w = 8  -> seq = 64
    dim_head = 32
    h = w = fmap
    scale = dim_head ** (-0.5)

    key = jax.random.PRNGKey(0)
    k1, k2, k3 = jax.random.split(key, 3)
    rel_height = jax.random.normal(k1, (2 * h - 1, dim_head), jnp.float32) * scale
    rel_width = jax.random.normal(k2, (2 * w - 1, dim_head), jnp.float32) * scale
    q = jax.random.normal(k3, (batch, heads, h * w, dim_head), jnp.float32)

    out = rel_pos_emb_pallas(q, rel_height, rel_width, (h, w))
    out = jax.block_until_ready(out)
    assert out.shape == (batch, heads, h * w, h * w)
    assert out.dtype == q.dtype

    ref = rel_pos_emb_ref(q, rel_height, rel_width, (h, w))
    err = float(jnp.max(jnp.abs(out.astype(jnp.float32) - ref)))
    assert jnp.allclose(out.astype(jnp.float32), ref, atol=1e-1, rtol=1e-1), \
        f"max abs err vs fp32 reference {err}"

    print("KERNEL_OK")
</pallas_src>

<mosaic_0001>
module attributes {stable_mosaic.version = 11 : i64} {
  func.func @_relpos_kernel(%arg0: i32, %arg1: memref<2x4x64x32xf32, #tpu.memory_space<vmem>>, %arg2: memref<32x128xf32, #tpu.memory_space<vmem>>, %arg3: memref<64x128xf32, #tpu.memory_space<vmem>>, %arg4: memref<128x64xf32, #tpu.memory_space<vmem>>, %arg5: memref<2x4x64x64xf32, #tpu.memory_space<vmem>>) attributes {dimension_semantics = [#tpu.dimension_semantics<parallel>], iteration_bounds = array<i64: 1>, scalar_prefetch = 0 : i64, scratch_operands = 0 : i64, tpu.core_type = #tpu.core_type<tc>, window_params = [{transform_indices = @transform_0, window_bounds = array<i64: 2, 4, 64, 32>}, {pipeline_mode = #tpu.pipeline_mode<synchronous>, transform_indices = @transform_1, window_bounds = array<i64: 32, 128>}, {transform_indices = @transform_2, window_bounds = array<i64: 64, 128>}, {pipeline_mode = #tpu.pipeline_mode<synchronous>, transform_indices = @transform_3, window_bounds = array<i64: 128, 64>}, {transform_indices = @transform_4, window_bounds = array<i64: 2, 4, 64, 64>}]} {
    %c0 = arith.constant 0 : index
    %c0_0 = arith.constant 0 : index
    %c0_1 = arith.constant 0 : index
    %c0_2 = arith.constant 0 : index
    %0 = vector.load %arg1[%c0, %c0_0, %c0_1, %c0_2] : memref<2x4x64x32xf32, #tpu.memory_space<vmem>>, vector<2x4x64x32xf32>
    %1 = vector.shape_cast %0 : vector<2x4x64x32xf32> to vector<512x32xf32>
    %c0_3 = arith.constant 0 : index
    %c0_4 = arith.constant 0 : index
    %2 = vector.load %arg2[%c0_3, %c0_4] : memref<32x128xf32, #tpu.memory_space<vmem>>, vector<32x128xf32>
    %cst = arith.constant dense<0.000000e+00> : vector<512x128xf32>
    %3 = tpu.matmul %1, %2, %cst {dimension_numbers = #tpu.dot_dimension_numbers<[1], [0], [0], [1], [0, 0, 1, 1], [], []>} : vector<512x32xf32>, vector<32x128xf32>, vector<512x128xf32> -> vector<512x128xf32>
    %4 = vector.shape_cast %3 : vector<512x128xf32> to vector<8x64x128xf32>
    %c0_5 = arith.constant 0 : index
    %c0_6 = arith.constant 0 : index
    %5 = vector.load %arg3[%c0_5, %c0_6] : memref<64x128xf32, #tpu.memory_space<vmem>>, vector<64x128xf32>
    %6 = vector.shape_cast %5 : vector<64x128xf32> to vector<1x64x128xf32>
    %7 = vector.broadcast %6 : vector<1x64x128xf32> to vector<8x64x128xf32>
    %8 = arith.mulf %4, %7 : vector<8x64x128xf32>
    %9 = vector.shape_cast %8 : vector<8x64x128xf32> to vector<512x128xf32>
    %c0_7 = arith.constant 0 : index
    %c0_8 = arith.constant 0 : index
    %10 = vector.load %arg4[%c0_7, %c0_8] : memref<128x64xf32, #tpu.memory_space<vmem>>, vector<128x64xf32>
    %cst_9 = arith.constant dense<0.000000e+00> : vector<512x64xf32>
    %11 = tpu.matmul %9, %10, %cst_9 {dimension_numbers = #tpu.dot_dimension_numbers<[1], [0], [0], [1], [0, 0, 1, 1], [], []>} : vector<512x128xf32>, vector<128x64xf32>, vector<512x64xf32> -> vector<512x64xf32>
    %12 = vector.shape_cast %11 : vector<512x64xf32> to vector<2x4x64x64xf32>
    %c0_10 = arith.constant 0 : index
    %c0_11 = arith.constant 0 : index
    %c0_12 = arith.constant 0 : index
    %c0_13 = arith.constant 0 : index
    %13 = vector.load %arg5[%c0_10, %c0_11, %c0_12, %c0_13] : memref<2x4x64x64xf32, #tpu.memory_space<vmem>>, vector<2x4x64x64xf32>
    tpu.vector_store %arg5[%c0_10, %c0_11, %c0_12, %c0_13], %12 {strides = array<i32>} : memref<2x4x64x64xf32, #tpu.memory_space<vmem>>, vector<2x4x64x64xf32>,
    return
  }
  func.func @transform_0(%arg0: i32) -> (i32, i32, i32, i32) {
    %c0_i32 = arith.constant 0 : i32
    %c0_i32_0 = arith.constant 0 : i32
    %c0_i32_1 = arith.constant 0 : i32
    %c0_i32_2 = arith.constant 0 : i32
    return %c0_i32, %c0_i32_0, %arg0, %c0_i32_1 : i32, i32, i32, i32
  }
  func.func @transform_1(%arg0: i32) -> (i32, i32) {
    %c0_i32 = arith.constant 0 : i32
    %c0_i32_0 = arith.constant 0 : i32
    %c0_i32_1 = arith.constant 0 : i32
    return %c0_i32, %c0_i32_0 : i32, i32
  }
  func.func @transform_2(%arg0: i32) -> (i32, i32) {
    %c0_i32 = arith.constant 0 : i32
    %c0_i32_0 = arith.constant 0 : i32
    return %arg0, %c0_i32 : i32, i32
  }
  func.func @transform_3(%arg0: i32) -> (i32, i32) {
    %c0_i32 = arith.constant 0 : i32
    %c0_i32_0 = arith.constant 0 : i32
    %c0_i32_1 = arith.constant 0 : i32
    return %c0_i32, %c0_i32_0 : i32, i32
  }
  func.func @transform_4(%arg0: i32) -> (i32, i32, i32, i32) {
    %c0_i32 = arith.constant 0 : i32
    %c0_i32_0 = arith.constant 0 : i32
    %c0_i32_1 = arith.constant 0 : i32
    %c0_i32_2 = arith.constant 0 : i32
    return %c0_i32, %c0_i32_0, %arg0, %c0_i32_1 : i32, i32, i32, i32
  }
}

</mosaic_0001>

<llo_original>
// kernel: tpu_custom_call.1
$region0: #{tpu_custom_call.1}
  #allocation0 [shape = 'u32[]', space=smem, size = 0x4, offset = 0x4, fixed_abs, tag = 'smem constant byte address 0x4 - core index']
  #allocation1 [shape = 'u32[144,128]{1,0:T(1,128)}', space=vmem, size = 0x12000, scoped, tag = 'internal scratch']
  %s0 = inlined_call_operand.vmem [shape: f32[2,4,64,32], index: 0, kind: input, shape index: {}]
  %s1 = inlined_call_operand.vmem [shape: f32[32,128], index: 1, kind: input, shape index: {}]
  %s2 = inlined_call_operand.vmem [shape: f32[64,128], index: 2, kind: input, shape index: {}]
  %s3 = inlined_call_operand.vmem [shape: f32[128,64], index: 3, kind: input, shape index: {}]
  %s4 = inlined_call_operand.hbm [shape: f32[2,4,64,64], index: 4, kind: output, shape index: {}]
  %s5 = sld [smem:[#allocation0]]
  $region26: #{tpu_custom_call.1} parent=0
    _
  %s7 = ssub.s32 1, %s5
  %s8 = scalar_select 0, %s7, %s5
  $region1: #{tpu_custom_call.1} parent=0
    #allocation2 [shape = 'u8[262144]{0}', space=vmem, size = 0x40000, scoped, tag = 'output window, operand 0, single buffered']
    #allocation3 [shape = 's32[1]{0}', space=sflag, size = 0x4, scoped, tag = 'scoped memory for tpu_custom_call.1']
    %9 = vsyncpa [#allocation3], 0
    // Predicated region
    $region2: #{tpu_custom_call.1} parent=1 // pred_check
      _
    $region3: #{tpu_custom_call.1} parent=1 // pred_check_branch
      %11 = sbr.rel (0) target = $region5
    $region4: #{tpu_custom_call.1} parent=1 // pred_region
      _
    $region5: #{tpu_custom_call.1} parent=1 // pred_fallthru
      _
    // Predicated region
    $region6: #{tpu_custom_call.1} parent=1 // pred_check
      _
    $region7: #{tpu_custom_call.1} parent=1 // pred_check_branch
      %13 = sbr.rel (0) target = $region9
    $region8: #{tpu_custom_call.1} parent=1 // pred_region
      _
    $region9: #{tpu_custom_call.1} parent=1 // pred_fallthru
      _
    // Predicated region
    $region10: #{tpu_custom_call.1} parent=1 // pred_check
      _
    $region11: #{tpu_custom_call.1} parent=1 // pred_check_branch
      %15 = sbr.rel (0) target = $region13
    $region12: #{tpu_custom_call.1} parent=1 // pred_region
      _
    $region13: #{tpu_custom_call.1} parent=1 // pred_fallthru
      _
    // Predicated region
    $region14: #{tpu_custom_call.1} parent=1 // pred_check
      _
    $region15: #{tpu_custom_call.1} parent=1 // pred_check_branch
      %17 = sbr.rel (0) target = $region17
    $region16: #{tpu_custom_call.1} parent=1 // pred_region
      _
    $region17: #{tpu_custom_call.1} parent=1 // pred_fallthru
      _
    %v18 = vld [vmem:[%s0] sm:$0xff]
    %v19 = vld [vmem:[%s0 + $0x8] sm:$0xff]
    %v20 = vld [vmem:[%s0 + $0x10] sm:$0xff]
    %v21 = vld [vmem:[%s0 + $0x18] sm:$0xff]
    %v22 = vld [vmem:[%s0 + $0x20] sm:$0xff]
    %v23 = vld [vmem:[%s0 + $0x28] sm:$0xff]
    %v24 = vld [vmem:[%s0 + $0x30] sm:$0xff]
    %v25 = vld [vmem:[%s0 + $0x38] sm:$0xff]
    %v26 = vld [vmem:[%s0 + $0x40] sm:$0xff]
    %v27 = vld [vmem:[%s0 + $0x48] sm:$0xff]
    %v28 = vld [vmem:[%s0 + $0x50] sm:$0xff]
    %v29 = vld [vmem:[%s0 + $0x58] sm:$0xff]
    %v30 = vld [vmem:[%s0 + $0x60] sm:$0xff]
    %v31 = vld [vmem:[%s0 + $0x68] sm:$0xff]
    %v32 = vld [vmem:[%s0 + $0x70] sm:$0xff]
    %v33 = vld [vmem:[%s0 + $0x78] sm:$0xff]
    %v34 = vld [vmem:[%s0 + $0x80] sm:$0xff]
    %v35 = vld [vmem:[%s0 + $0x88] sm:$0xff]
    %v36 = vld [vmem:[%s0 + $0x90] sm:$0xff]
    %v37 = vld [vmem:[%s0 + $0x98] sm:$0xff]
    %v38 = vld [vmem:[%s0 + $0xa0] sm:$0xff]
    %v39 = vld [vmem:[%s0 + $0xa8] sm:$0xff]
    %v40 = vld [vmem:[%s0 + $0xb0] sm:$0xff]
    %v41 = vld [vmem:[%s0 + $0xb8] sm:$0xff]
    %v42 = vld [vmem:[%s0 + $0xc0] sm:$0xff]
    %v43 = vld [vmem:[%s0 + $0xc8] sm:$0xff]
    %v44 = vld [vmem:[%s0 + $0xd0] sm:$0xff]
    %v45 = vld [vmem:[%s0 + $0xd8] sm:$0xff]
    %v46 = vld [vmem:[%s0 + $0xe0] sm:$0xff]
    %v47 = vld [vmem:[%s0 + $0xe8] sm:$0xff]
    %v48 = vld [vmem:[%s0 + $0xf0] sm:$0xff]
    %v49 = vld [vmem:[%s0 + $0xf8] sm:$0xff]
    %v50 = vld [vmem:[%s0 + $0x100] sm:$0xff]
    %v51 = vld [vmem:[%s0 + $0x108] sm:$0xff]
    %v52 = vld [vmem:[%s0 + $0x110] sm:$0xff]
    %v53 = vld [vmem:[%s0 + $0x118] sm:$0xff]
    %v54 = vld [vmem:[%s0 + $0x120] sm:$0xff]
    %v55 = vld [vmem:[%s0 + $0x128] sm:$0xff]
    %v56 = vld [vmem:[%s0 + $0x130] sm:$0xff]
    %v57 = vld [vmem:[%s0 + $0x138] sm:$0xff]
    %v58 = vld [vmem:[%s0 + $0x140] sm:$0xff]
    %v59 = vld [vmem:[%s0 + $0x148] sm:$0xff]
    %v60 = vld [vmem:[%s0 + $0x150] sm:$0xff]
    %v61 = vld [vmem:[%s0 + $0x158] sm:$0xff]
    %v62 = vld [vmem:[%s0 + $0x160] sm:$0xff]
    %v63 = vld [vmem:[%s0 + $0x168] sm:$0xff]
    %v64 = vld [vmem:[%s0 + $0x170] sm:$0xff]
    %v65 = vld [vmem:[%s0 + $0x178] sm:$0xff]
    %v66 = vld [vmem:[%s0 + $0x180] sm:$0xff]
    %v67 = vld [vmem:[%s0 + $0x188] sm:$0xff]
    %v68 = vld [vmem:[%s0 + $0x190] sm:$0xff]
    %v69 = vld [vmem:[%s0 + $0x198] sm:$0xff]
    %v70 = vld [vmem:[%s0 + $0x1a0] sm:$0xff]
    %v71 = vld [vmem:[%s0 + $0x1a8] sm:$0xff]
    %v72 = vld [vmem:[%s0 + $0x1b0] sm:$0xff]
    %v73 = vld [vmem:[%s0 + $0x1b8] sm:$0xff]
    %v74 = vld [vmem:[%s0 + $0x1c0] sm:$0xff]
    %v75 = vld [vmem:[%s0 + $0x1c8] sm:$0xff]
    %v76 = vld [vmem:[%s0 + $0x1d0] sm:$0xff]
    %v77 = vld [vmem:[%s0 + $0x1d8] sm:$0xff]
    %v78 = vld [vmem:[%s0 + $0x1e0] sm:$0xff]
    %v79 = vld [vmem:[%s0 + $0x1e8] sm:$0xff]
    %v80 = vld [vmem:[%s0 + $0x1f0] sm:$0xff]
    %v81 = vld [vmem:[%s0 + $0x1f8] sm:$0xff]
    %v82 = vld [vmem:[%s1] sm:$0xff]
    %v83 = vld [vmem:[%s1 + $0x8] sm:$0xff]
    %v84 = vld [vmem:[%s1 + $0x10] sm:$0xff]
    %v85 = vld [vmem:[%s1 + $0x18] sm:$0xff]
    %vm86 = vcmask 261120
    %v88 = vsel %vm86, %v18, 0
    %v91 = vsel %vm86, %v19, 0
    %v94 = vsel %vm86, %v20, 0
    %v97 = vsel %vm86, %v21, 0
    %v100 = vsel %vm86, %v22, 0
    %v103 = vsel %vm86, %v23, 0
    %v106 = vsel %vm86, %v24, 0
    %v109 = vsel %vm86, %v25, 0
    %v112 = vsel %vm86, %v26, 0
    %v115 = vsel %vm86, %v27, 0
    %v118 = vsel %vm86, %v28, 0
    %v121 = vsel %vm86, %v29, 0
    %v124 = vsel %vm86, %v30, 0
    %v127 = vsel %vm86, %v31, 0
    %v130 = vsel %vm86, %v32, 0
    %v133 = vsel %vm86, %v33, 0
    %v136 = vsel %vm86, %v34, 0
    %v139 = vsel %vm86, %v35, 0
    %v142 = vsel %vm86, %v36, 0
    %v145 = vsel %vm86, %v37, 0
    %v148 = vsel %vm86, %v38, 0
    %v151 = vsel %vm86, %v39, 0
    %v154 = vsel %vm86, %v40, 0
    %v157 = vsel %vm86, %v41, 0
    %v160 = vsel %vm86, %v42, 0
    %v163 = vsel %vm86, %v43, 0
    %v166 = vsel %vm86, %v44, 0
    %v169 = vsel %vm86, %v45, 0
    %v172 = vsel %vm86, %v46, 0
    %v175 = vsel %vm86, %v47, 0
    %v178 = vsel %vm86, %v48, 0
    %v181 = vsel %vm86, %v49, 0
    %v184 = vsel %vm86, %v50, 0
    %v187 = vsel %vm86, %v51, 0
    %v190 = vsel %vm86, %v52, 0
    %v193 = vsel %vm86, %v53, 0
    %v196 = vsel %vm86, %v54, 0
    %v199 = vsel %vm86, %v55, 0
    %v202 = vsel %vm86, %v56, 0
    %v205 = vsel %vm86, %v57, 0
    %v208 = vsel %vm86, %v58, 0
    %v211 = vsel %vm86, %v59, 0
    %v214 = vsel %vm86, %v60, 0
    %v217 = vsel %vm86, %v61, 0
    %v220 = vsel %vm86, %v62, 0
    %v223 = vsel %vm86, %v63, 0
    %v226 = vsel %vm86, %v64, 0
    %v229 = vsel %vm86, %v65, 0
    %v232 = vsel %vm86, %v66, 0
    %v235 = vsel %vm86, %v67, 0
    %v238 = vsel %vm86, %v68, 0
    %v241 = vsel %vm86, %v69, 0
    %v244 = vsel %vm86, %v70, 0
    %v247 = vsel %vm86, %v71, 0
    %v250 = vsel %vm86, %v72, 0
    %v253 = vsel %vm86, %v73, 0
    %v256 = vsel %vm86, %v74, 0
    %v259 = vsel %vm86, %v75, 0
    %v262 = vsel %vm86, %v76, 0
    %v265 = vsel %vm86, %v77, 0
    %v268 = vsel %vm86, %v78, 0
    %v271 = vsel %vm86, %v79, 0
    %v274 = vsel %vm86, %v80, 0
    %v277 = vsel %vm86, %v81, 0
    %279 = vmatprep.subr.mxu0 0.0
    %280 = vmatpush1.msra.mxu0 0.0
    %281 = vmatprep.subr.mxu0 0.0
    %282 = vmatpush1.msra.mxu0 0.0
    %283 = vmatprep.subr.mxu0 0.0
    %284 = vmatpush1.msra.mxu0 0.0
    %285 = vmatprep.subr.mxu0 0.0
    %286 = vmatpush1.msra.mxu0 0.0
    %287 = vmatprep.subr.mxu0 0.0
    %288 = vmatpush1.msra.mxu0 0.0
    %289 = vmatprep.subr.mxu0 0.0
    %290 = vmatpush1.msra.mxu0 0.0
    %291 = vmatprep.subr.mxu0 0.0
    %292 = vmatpush1.msra.mxu0 0.0
    %293 = vmatprep.subr.mxu0 0.0
    %294 = vmatpush1.msra.mxu0 0.0
    %295 = vmatprep.subr.mxu0 0.0
    %296 = vmatpush1.msra.mxu0 0.0
    %297 = vmatprep.subr.mxu0 0.0
    %298 = vmatpush1.msra.mxu0 0.0
    %299 = vmatprep.subr.mxu0 0.0
    %300 = vmatpush1.msra.mxu0 0.0
    %301 = vmatprep.subr.mxu0 0.0
    %302 = vmatpush1.msra.mxu0 0.0
    %303 = vmatprep.subr.mxu0 0.0
    %304 = vmatpush1.msra.mxu0 %v85
    %305 = vmatprep.subr.mxu0 0.0
    %306 = vmatpush1.msra.mxu0 %v84
    %307 = vmatprep.subr.mxu0 0.0
    %308 = vmatpush1.msra.mxu0 %v83
    %309 = vmatprep.subr.mxu0 0.0
    %310 = vmatpush1.msra.mxu0 %v82
    %311 = vmatprep.subr.mxu0 0.0
    %312 = vmatpush2.msra.mxu0 0.0
    %313 = vmatprep.subr.mxu0 0.0
    %314 = vmatpush2.msra.mxu0 0.0
    %315 = vmatprep.subr.mxu0 0.0
    %316 = vmatpush2.msra.mxu0 0.0
    %317 = vmatprep.subr.mxu0 0.0
    %318 = vmatpush2.msra.mxu0 0.0
    %319 = vmatprep.subr.mxu0 0.0
    %320 = vmatpush2.msra.mxu0 0.0
    %321 = vmatprep.subr.mxu0 0.0
    %322 = vmatpush2.msra.mxu0 0.0
    %323 = vmatprep.subr.mxu0 0.0
    %324 = vmatpush2.msra.mxu0 0.0
    %325 = vmatprep.subr.mxu0 0.0
    %326 = vmatpush2.msra.mxu0 0.0
    %327 = vmatprep.subr.mxu0 0.0
    %328 = vmatpush2.msra.mxu0 0.0
    %329 = vmatprep.subr.mxu0 0.0
    %330 = vmatpush2.msra.mxu0 0.0
    %331 = vmatprep.subr.mxu0 0.0
    %332 = vmatpush2.msra.mxu0 0.0
    %333 = vmatprep.subr.mxu0 0.0
    %334 = vmatpush2.msra.mxu0 0.0
    %335 = vmatprep.subr.mxu0 0.0
    %336 = vmatpush2.msra.mxu0 0.0
    %337 = vmatprep.subr.mxu0 0.0
    %338 = vmatpush2.msra.mxu0 0.0
    %339 = vmatprep.subr.mxu0 0.0
    %340 = vmatpush2.msra.mxu0 0.0
    %341 = vmatprep.subr.mxu0 0.0
    %342 = vmatpush2.msra.mxu0 0.0
    %343 = vmatprep.mubr.f32.mxu0 0.0
    %344 = vmatmul.mubr.f32.gmra.mxu0 %v88
    %v345 = vpop.f32.mrf.mxu0
    %v346 = vadd.f32 0.0, %v345
    %v347 = vpop.f32.mrf.mxu0
    %348 = vmatprep.mubr.f32.mxu0 0.0
    %349 = vmatmul.mubr.f32.gmra.mxu0 %v91
    %v350 = vpop.f32.mrf.mxu0
    %v351 = vadd.f32 0.0, %v350
    %v352 = vpop.f32.mrf.mxu0
    %353 = vmatprep.mubr.f32.mxu0 0.0
    %354 = vmatmul.mubr.f32.gmra.mxu0 %v94
    %v355 = vpop.f32.mrf.mxu0
    %v356 = vadd.f32 0.0, %v355
    %v357 = vpop.f32.mrf.mxu0
    %358 = vmatprep.mubr.f32.mxu0 0.0
    %359 = vmatmul.mubr.f32.gmra.mxu0 %v97
    %v360 = vpop.f32.mrf.mxu0
    %v361 = vadd.f32 0.0, %v360
    %v362 = vpop.f32.mrf.mxu0
    %363 = vmatprep.mubr.f32.mxu0 0.0
    %364 = vmatmul.mubr.f32.gmra.mxu0 %v100
    %v365 = vpop.f32.mrf.mxu0
    %v366 = vadd.f32 0.0, %v365
    %v367 = vpop.f32.mrf.mxu0
    %368 = vmatprep.mubr.f32.mxu0 0.0
    %369 = vmatmul.mubr.f32.gmra.mxu0 %v103
    %v370 = vpop.f32.mrf.mxu0
    %v371 = vadd.f32 0.0, %v370
    %v372 = vpop.f32.mrf.mxu0
    %373 = vmatprep.mubr.f32.mxu0 0.0
    %374 = vmatmul.mubr.f32.gmra.mxu0 %v106
    %v375 = vpop.f32.mrf.mxu0
    %v376 = vadd.f32 0.0, %v375
    %v377 = vpop.f32.mrf.mxu0
    %378 = vmatprep.mubr.f32.mxu0 0.0
    %379 = vmatmul.mubr.f32.gmra.mxu0 %v109
    %v380 = vpop.f32.mrf.mxu0
    %v381 = vadd.f32 0.0, %v380
    %v382 = vpop.f32.mrf.mxu0
    %383 = vmatprep.mubr.f32.mxu0 0.0
    %384 = vmatmul.mubr.f32.gmra.mxu0 %v112
    %v385 = vpop.f32.mrf.mxu0
    %v386 = vadd.f32 0.0, %v385
    %v387 = vpop.f32.mrf.mxu0
    %388 = vmatprep.mubr.f32.mxu0 0.0
    %389 = vmatmul.mubr.f32.gmra.mxu0 %v115
    %v390 = vpop.f32.mrf.mxu0
    %v391 = vadd.f32 0.0, %v390
    %v392 = vpop.f32.mrf.mxu0
    %393 = vmatprep.mubr.f32.mxu0 0.0
    %394 = vmatmul.mubr.f32.gmra.mxu0 %v118
    %v395 = vpop.f32.mrf.mxu0
    %v396 = vadd.f32 0.0, %v395
    %v397 = vpop.f32.mrf.mxu0
    %398 = vmatprep.mubr.f32.mxu0 0.0
    %399 = vmatmul.mubr.f32.gmra.mxu0 %v121
    %v400 = vpop.f32.mrf.mxu0
    %v401 = vadd.f32 0.0, %v400
    %v402 = vpop.f32.mrf.mxu0
    %403 = vmatprep.mubr.f32.mxu0 0.0
    %404 = vmatmul.mubr.f32.gmra.mxu0 %v124
    %v405 = vpop.f32.mrf.mxu0
    %v406 = vadd.f32 0.0, %v405
    %v407 = vpop.f32.mrf.mxu0
    %408 = vmatprep.mubr.f32.mxu0 0.0
    %409 = vmatmul.mubr.f32.gmra.mxu0 %v127
    %v410 = vpop.f32.mrf.mxu0
    %v411 = vadd.f32 0.0, %v410
    %v412 = vpop.f32.mrf.mxu0
    %413 = vmatprep.mubr.f32.mxu0 0.0
    %414 = vmatmul.mubr.f32.gmra.mxu0 %v130
    %v415 = vpop.f32.mrf.mxu0
    %v416 = vadd.f32 0.0, %v415
    %v417 = vpop.f32.mrf.mxu0
    %418 = vmatprep.mubr.f32.mxu0 0.0
    %419 = vmatmul.mubr.f32.gmra.mxu0 %v133
    %v420 = vpop.f32.mrf.mxu0
    %v421 = vadd.f32 0.0, %v420
    %v422 = vpop.f32.mrf.mxu0
    %423 = vmatprep.mubr.f32.mxu0 0.0
    %424 = vmatmul.mubr.f32.gmra.mxu0 %v136
    %v425 = vpop.f32.mrf.mxu0
    %v426 = vadd.f32 0.0, %v425
    %v427 = vpop.f32.mrf.mxu0
    %428 = vmatprep.mubr.f32.mxu0 0.0
    %429 = vmatmul.mubr.f32.gmra.mxu0 %v139
    %v430 = vpop.f32.mrf.mxu0
    %v431 = vadd.f32 0.0, %v430
    %v432 = vpop.f32.mrf.mxu0
    %433 = vmatprep.mubr.f32.mxu0 0.0
    %434 = vmatmul.mubr.f32.gmra.mxu0 %v142
    %v435 = vpop.f32.mrf.mxu0
    %v436 = vadd.f32 0.0, %v435
    %v437 = vpop.f32.mrf.mxu0
    %438 = vmatprep.mubr.f32.mxu0 0.0
    %439 = vmatmul.mubr.f32.gmra.mxu0 %v145
    %v440 = vpop.f32.mrf.mxu0
    %v441 = vadd.f32 0.0, %v440
    %v442 = vpop.f32.mrf.mxu0
    %443 = vmatprep.mubr.f32.mxu0 0.0
    %444 = vmatmul.mubr.f32.gmra.mxu0 %v148
    %v445 = vpop.f32.mrf.mxu0
    %v446 = vadd.f32 0.0, %v445
    %v447 = vpop.f32.mrf.mxu0
    %448 = vmatprep.mubr.f32.mxu0 0.0
    %449 = vmatmul.mubr.f32.gmra.mxu0 %v151
    %v450 = vpop.f32.mrf.mxu0
    %v451 = vadd.f32 0.0, %v450
    %v452 = vpop.f32.mrf.mxu0
    %453 = vmatprep.mubr.f32.mxu0 0.0
    %454 = vmatmul.mubr.f32.gmra.mxu0 %v154
    %v455 = vpop.f32.mrf.mxu0
    %v456 = vadd.f32 0.0, %v455
    %v457 = vpop.f32.mrf.mxu0
    %458 = vmatprep.mubr.f32.mxu0 0.0
    %459 = vmatmul.mubr.f32.gmra.mxu0 %v157
    %v460 = vpop.f32.mrf.mxu0
    %v461 = vadd.f32 0.0, %v460
    %v462 = vpop.f32.mrf.mxu0
    %463 = vmatprep.mubr.f32.mxu0 0.0
    %464 = vmatmul.mubr.f32.gmra.mxu0 %v160
    %v465 = vpop.f32.mrf.mxu0
    %v466 = vadd.f32 0.0, %v465
    %v467 = vpop.f32.mrf.mxu0
    %468 = vmatprep.mubr.f32.mxu0 0.0
    %469 = vmatmul.mubr.f32.gmra.mxu0 %v163
    %v470 = vpop.f32.mrf.mxu0
    %v471 = vadd.f32 0.0, %v470
    %v472 = vpop.f32.mrf.mxu0
    %473 = vmatprep.mubr.f32.mxu0 0.0
    %474 = vmatmul.mubr.f32.gmra.mxu0 %v166
    %v475 = vpop.f32.mrf.mxu0
    %v476 = vadd.f32 0.0, %v475
    %v477 = vpop.f32.mrf.mxu0
    %478 = vmatprep.mubr.f32.mxu0 0.0
    %479 = vmatmul.mubr.f32.gmra.mxu0 %v169
    %v480 = vpop.f32.mrf.mxu0
    %v481 = vadd.f32 0.0, %v480
    %v482 = vpop.f32.mrf.mxu0
    %483 = vmatprep.mubr.f32.mxu0 0.0
    %484 = vmatmul.mubr.f32.gmra.mxu0 %v172
    %v485 = vpop.f32.mrf.mxu0
    %v486 = vadd.f32 0.0, %v485
    %v487 = vpop.f32.mrf.mxu0
    %488 = vmatprep.mubr.f32.mxu0 0.0
    %489 = vmatmul.mubr.f32.gmra.mxu0 %v175
    %v490 = vpop.f32.mrf.mxu0
    %v491 = vadd.f32 0.0, %v490
    %v492 = vpop.f32.mrf.mxu0
    %493 = vmatprep.mubr.f32.mxu0 0.0
    %494 = vmatmul.mubr.f32.gmra.mxu0 %v178
    %v495 = vpop.f32.mrf.mxu0
    %v496 = vadd.f32 0.0, %v495
    %v497 = vpop.f32.mrf.mxu0
    %498 = vmatprep.mubr.f32.mxu0 0.0
    %499 = vmatmul.mubr.f32.gmra.mxu0 %v181
    %v500 = vpop.f32.mrf.mxu0
    %v501 = vadd.f32 0.0, %v500
    %v502 = vpop.f32.mrf.mxu0
    %503 = vmatprep.mubr.f32.mxu0 0.0
    %504 = vmatmul.mubr.f32.gmra.mxu0 %v184
    %v505 = vpop.f32.mrf.mxu0
    %v506 = vadd.f32 0.0, %v505
    %v507 = vpop.f32.mrf.mxu0
    %508 = vmatprep.mubr.f32.mxu0 0.0
    %509 = vmatmul.mubr.f32.gmra.mxu0 %v187
    %v510 = vpop.f32.mrf.mxu0
    %v511 = vadd.f32 0.0, %v510
    %v512 = vpop.f32.mrf.mxu0
    %513 = vmatprep.mubr.f32.mxu0 0.0
    %514 = vmatmul.mubr.f32.gmra.mxu0 %v190
    %v515 = vpop.f32.mrf.mxu0
    %v516 = vadd.f32 0.0, %v515
    %v517 = vpop.f32.mrf.mxu0
    %518 = vmatprep.mubr.f32.mxu0 0.0
    %519 = vmatmul.mubr.f32.gmra.mxu0 %v193
    %v520 = vpop.f32.mrf.mxu0
    %v521 = vadd.f32 0.0, %v520
    %v522 = vpop.f32.mrf.mxu0
    %523 = vmatprep.mubr.f32.mxu0 0.0
    %524 = vmatmul.mubr.f32.gmra.mxu0 %v196
    %v525 = vpop.f32.mrf.mxu0
    %v526 = vadd.f32 0.0, %v525
    %v527 = vpop.f32.mrf.mxu0
    %528 = vmatprep.mubr.f32.mxu0 0.0
    %529 = vmatmul.mubr.f32.gmra.mxu0 %v199
    %v530 = vpop.f32.mrf.mxu0
    %v531 = vadd.f32 0.0, %v530
    %v532 = vpop.f32.mrf.mxu0
    %533 = vmatprep.mubr.f32.mxu0 0.0
    %534 = vmatmul.mubr.f32.gmra.mxu0 %v202
    %v535 = vpop.f32.mrf.mxu0
    %v536 = vadd.f32 0.0, %v535
    %v537 = vpop.f32.mrf.mxu0
    %538 = vmatprep.mubr.f32.mxu0 0.0
    %539 = vmatmul.mubr.f32.gmra.mxu0 %v205
    %v540 = vpop.f32.mrf.mxu0
    %v541 = vadd.f32 0.0, %v540
    %v542 = vpop.f32.mrf.mxu0
    %543 = vmatprep.mubr.f32.mxu0 0.0
    %544 = vmatmul.mubr.f32.gmra.mxu0 %v208
    %v545 = vpop.f32.mrf.mxu0
    %v546 = vadd.f32 0.0, %v545
    %v547 = vpop.f32.mrf.mxu0
    %548 = vmatprep.mubr.f32.mxu0 0.0
    %549 = vmatmul.mubr.f32.gmra.mxu0 %v211
    %v550 = vpop.f32.mrf.mxu0
    %v551 = vadd.f32 0.0, %v550
    %v552 = vpop.f32.mrf.mxu0
    %553 = vmatprep.mubr.f32.mxu0 0.0
    %554 = vmatmul.mubr.f32.gmra.mxu0 %v214
    %v555 = vpop.f32.mrf.mxu0
    %v556 = vadd.f32 0.0, %v555
    %v557 = vpop.f32.mrf.mxu0
    %558 = vmatprep.mubr.f32.mxu0 0.0
    %559 = vmatmul.mubr.f32.gmra.mxu0 %v217
    %v560 = vpop.f32.mrf.mxu0
    %v561 = vadd.f32 0.0, %v560
    %v562 = vpop.f32.mrf.mxu0
    %563 = vmatprep.mubr.f32.mxu0 0.0
    %564 = vmatmul.mubr.f32.gmra.mxu0 %v220
    %v565 = vpop.f32.mrf.mxu0
    %v566 = vadd.f32 0.0, %v565
    %v567 = vpop.f32.mrf.mxu0
    %568 = vmatprep.mubr.f32.mxu0 0.0
    %569 = vmatmul.mubr.f32.gmra.mxu0 %v223
    %v570 = vpop.f32.mrf.mxu0
    %v571 = vadd.f32 0.0, %v570
    %v572 = vpop.f32.mrf.mxu0
    %573 = vmatprep.mubr.f32.mxu0 0.0
    %574 = vmatmul.mubr.f32.gmra.mxu0 %v226
    %v575 = vpop.f32.mrf.mxu0
    %v576 = vadd.f32 0.0, %v575
    %v577 = vpop.f32.mrf.mxu0
    %578 = vmatprep.mubr.f32.mxu0 0.0
    %579 = vmatmul.mubr.f32.gmra.mxu0 %v229
    %v580 = vpop.f32.mrf.mxu0
    %v581 = vadd.f32 0.0, %v580
    %v582 = vpop.f32.mrf.mxu0
    %583 = vmatprep.mubr.f32.mxu0 0.0
    %584 = vmatmul.mubr.f32.gmra.mxu0 %v232
    %v585 = vpop.f32.mrf.mxu0
    %v586 = vadd.f32 0.0, %v585
    %v587 = vpop.f32.mrf.mxu0
    %588 = vmatprep.mubr.f32.mxu0 0.0
    %589 = vmatmul.mubr.f32.gmra.mxu0 %v235
    %v590 = vpop.f32.mrf.mxu0
    %v591 = vadd.f32 0.0, %v590
    %v592 = vpop.f32.mrf.mxu0
    %593 = vmatprep.mubr.f32.mxu0 0.0
    %594 = vmatmul.mubr.f32.gmra.mxu0 %v238
    %v595 = vpop.f32.mrf.mxu0
    %v596 = vadd.f32 0.0, %v595
    %v597 = vpop.f32.mrf.mxu0
    %598 = vmatprep.mubr.f32.mxu0 0.0
    %599 = vmatmul.mubr.f32.gmra.mxu0 %v241
    %v600 = vpop.f32.mrf.mxu0
    %v601 = vadd.f32 0.0, %v600
    %v602 = vpop.f32.mrf.mxu0
    %603 = vmatprep.mubr.f32.mxu0 0.0
    %604 = vmatmul.mubr.f32.gmra.mxu0 %v244
    %v605 = vpop.f32.mrf.mxu0
    %v606 = vadd.f32 0.0, %v605
    %v607 = vpop.f32.mrf.mxu0
    %608 = vmatprep.mubr.f32.mxu0 0.0
    %609 = vmatmul.mubr.f32.gmra.mxu0 %v247
    %v610 = vpop.f32.mrf.mxu0
    %v611 = vadd.f32 0.0, %v610
    %v612 = vpop.f32.mrf.mxu0
    %613 = vmatprep.mubr.f32.mxu0 0.0
    %614 = vmatmul.mubr.f32.gmra.mxu0 %v250
    %v615 = vpop.f32.mrf.mxu0
    %v616 = vadd.f32 0.0, %v615
    %v617 = vpop.f32.mrf.mxu0
    %618 = vmatprep.mubr.f32.mxu0 0.0
    %619 = vmatmul.mubr.f32.gmra.mxu0 %v253
    %v620 = vpop.f32.mrf.mxu0
    %v621 = vadd.f32 0.0, %v620
    %v622 = vpop.f32.mrf.mxu0
    %623 = vmatprep.mubr.f32.mxu0 0.0
    %624 = vmatmul.mubr.f32.gmra.mxu0 %v256
    %v625 = vpop.f32.mrf.mxu0
    %v626 = vadd.f32 0.0, %v625
    %v627 = vpop.f32.mrf.mxu0
    %628 = vmatprep.mubr.f32.mxu0 0.0
    %629 = vmatmul.mubr.f32.gmra.mxu0 %v259
    %v630 = vpop.f32.mrf.mxu0
    %v631 = vadd.f32 0.0, %v630
    %v632 = vpop.f32.mrf.mxu0
    %633 = vmatprep.mubr.f32.mxu0 0.0
    %634 = vmatmul.mubr.f32.gmra.mxu0 %v262
    %v635 = vpop.f32.mrf.mxu0
    %v636 = vadd.f32 0.0, %v635
    %v637 = vpop.f32.mrf.mxu0
    %638 = vmatprep.mubr.f32.mxu0 0.0
    %639 = vmatmul.mubr.f32.gmra.mxu0 %v265
    %v640 = vpop.f32.mrf.mxu0
    %v641 = vadd.f32 0.0, %v640
    %v642 = vpop.f32.mrf.mxu0
    %643 = vmatprep.mubr.f32.mxu0 0.0
    %644 = vmatmul.mubr.f32.gmra.mxu0 %v268
    %v645 = vpop.f32.mrf.mxu0
    %v646 = vadd.f32 0.0, %v645
    %v647 = vpop.f32.mrf.mxu0
    %648 = vmatprep.mubr.f32.mxu0 0.0
    %649 = vmatmul.mubr.f32.gmra.mxu0 %v271
    %v650 = vpop.f32.mrf.mxu0
    %v651 = vadd.f32 0.0, %v650
    %v652 = vpop.f32.mrf.mxu0
    %653 = vmatprep.mubr.f32.mxu0 0.0
    %654 = vmatmul.mubr.f32.gmra.mxu0 %v274
    %v655 = vpop.f32.mrf.mxu0
    %v656 = vadd.f32 0.0, %v655
    %v657 = vpop.f32.mrf.mxu0
    %658 = vmatprep.mubr.f32.mxu0 0.0
    %659 = vmatmul.mubr.f32.gmra.mxu0 %v277
    %v660 = vpop.f32.mrf.mxu0
    %v661 = vadd.f32 0.0, %v660
    %v662 = vpop.f32.mrf.mxu0
    %663 = vdwg.mxu0
    %v664 = vld [vmem:[%s2] sm:$0xff]
    %v665 = vld [vmem:[%s2 + $0x8] sm:$0xff]
    %v666 = vld [vmem:[%s2 + $0x10] sm:$0xff]
    %v667 = vld [vmem:[%s2 + $0x18] sm:$0xff]
    %v668 = vld [vmem:[%s2 + $0x20] sm:$0xff]
    %v669 = vld [vmem:[%s2 + $0x28] sm:$0xff]
    %v670 = vld [vmem:[%s2 + $0x30] sm:$0xff]
    %v671 = vld [vmem:[%s2 + $0x38] sm:$0xff]
    %v672 = vmul.f32 %v346, %v664
    %v673 = vmul.f32 %v351, %v665
    %v674 = vmul.f32 %v356, %v666
    %v675 = vmul.f32 %v361, %v667
    %v676 = vmul.f32 %v366, %v668
    %v677 = vmul.f32 %v371, %v669
    %v678 = vmul.f32 %v376, %v670
    %v679 = vmul.f32 %v381, %v671
    %v680 = vmul.f32 %v386, %v664
    %v681 = vmul.f32 %v391, %v665
    %v682 = vmul.f32 %v396, %v666
    %v683 = vmul.f32 %v401, %v667
    %v684 = vmul.f32 %v406, %v668
    %v685 = vmul.f32 %v411, %v669
    %v686 = vmul.f32 %v416, %v670
    %v687 = vmul.f32 %v421, %v671
    %v688 = vmul.f32 %v426, %v664
    %v689 = vmul.f32 %v431, %v665
    %v690 = vmul.f32 %v436, %v666
    %v691 = vmul.f32 %v441, %v667
    %v692 = vmul.f32 %v446, %v668
    %v693 = vmul.f32 %v451, %v669
    %v694 = vmul.f32 %v456, %v670
    %v695 = vmul.f32 %v461, %v671
    %v696 = vmul.f32 %v466, %v664
    %v697 = vmul.f32 %v471, %v665
    %v698 = vmul.f32 %v476, %v666
    %v699 = vmul.f32 %v481, %v667
    %v700 = vmul.f32 %v486, %v668
    %v701 = vmul.f32 %v491, %v669
    %v702 = vmul.f32 %v496, %v670
    %v703 = vmul.f32 %v501, %v671
    %v704 = vmul.f32 %v506, %v664
    %v705 = vmul.f32 %v511, %v665
    %v706 = vmul.f32 %v516, %v666
    %v707 = vmul.f32 %v521, %v667
    %v708 = vmul.f32 %v526, %v668
    %v709 = vmul.f32 %v531, %v669
    %v710 = vmul.f32 %v536, %v670
    %v711 = vmul.f32 %v541, %v671
    %v712 = vmul.f32 %v546, %v664
    %v713 = vmul.f32 %v551, %v665
    %v714 = vmul.f32 %v556, %v666
    %v715 = vmul.f32 %v561, %v667
    %v716 = vmul.f32 %v566, %v668
    %v717 = vmul.f32 %v571, %v669
    %v718 = vmul.f32 %v576, %v670
    %v719 = vmul.f32 %v581, %v671
    %v720 = vmul.f32 %v586, %v664
    %v721 = vmul.f32 %v591, %v665
    %v722 = vmul.f32 %v596, %v666
    %v723 = vmul.f32 %v601, %v667
    %v724 = vmul.f32 %v606, %v668
    %v725 = vmul.f32 %v611, %v669
    %v726 = vmul.f32 %v616, %v670
    %v727 = vmul.f32 %v621, %v671
    %v728 = vmul.f32 %v626, %v664
    %v729 = vmul.f32 %v631, %v665
    %v730 = vmul.f32 %v636, %v666
    %v731 = vmul.f32 %v641, %v667
    %v732 = vmul.f32 %v646, %v668
    %v733 = vmul.f32 %v651, %v669
    %v734 = vmul.f32 %v656, %v670
    %v735 = vmul.f32 %v661, %v671
    %v736 = vld [vmem:[%s3] sm:$0xff]
    %v737 = vld [vmem:[%s3 + $0x8] sm:$0xff]
    %v738 = vld [vmem:[%s3 + $0x10] sm:$0xff]
    %v739 = vld [vmem:[%s3 + $0x18] sm:$0xff]
    %v740 = vld [vmem:[%s3 + $0x20] sm:$0xff]
    %v741 = vld [vmem:[%s3 + $0x28] sm:$0xff]
    %v742 = vld [vmem:[%s3 + $0x30] sm:$0xff]
    %v743 = vld [vmem:[%s3 + $0x38] sm:$0xff]
    %v744 = vld [vmem:[%s3 + $0x40] sm:$0xff]
    %v745 = vld [vmem:[%s3 + $0x48] sm:$0xff]
    %v746 = vld [vmem:[%s3 + $0x50] sm:$0xff]
    %v747 = vld [vmem:[%s3 + $0x58] sm:$0xff]
    %v748 = vld [vmem:[%s3 + $0x60] sm:$0xff]
    %v749 = vld [vmem:[%s3 + $0x68] sm:$0xff]
    %v750 = vld [vmem:[%s3 + $0x70] sm:$0xff]
    %v751 = vld [vmem:[%s3 + $0x78] sm:$0xff]
    %752 = vmatprep.subr.mxu0 0.0
    %753 = vmatpush1.msra.mxu0 %v751
    %754 = vmatprep.subr.mxu0 0.0
    %755 = vmatpush1.msra.mxu0 %v750
    %756 = vmatprep.subr.mxu0 0.0
    %757 = vmatpush1.msra.mxu0 %v749
    %758 = vmatprep.subr.mxu0 0.0
    %759 = vmatpush1.msra.mxu0 %v748
    %760 = vmatprep.subr.mxu0 0.0
    %761 = vmatpush1.msra.mxu0 %v747
    %762 = vmatprep.subr.mxu0 0.0
    %763 = vmatpush1.msra.mxu0 %v746
    %764 = vmatprep.subr.mxu0 0.0
    %765 = vmatpush1.msra.mxu0 %v745
    %766 = vmatprep.subr.mxu0 0.0
    %767 = vmatpush1.msra.mxu0 %v744
    %768 = vmatprep.subr.mxu0 0.0
    %769 = vmatpush1.msra.mxu0 %v743
    %770 = vmatprep.subr.mxu0 0.0
    %771 = vmatpush1.msra.mxu0 %v742
    %772 = vmatprep.subr.mxu0 0.0
    %773 = vmatpush1.msra.mxu0 %v741
    %774 = vmatprep.subr.mxu0 0.0
    %775 = vmatpush1.msra.mxu0 %v740
    %776 = vmatprep.subr.mxu0 0.0
    %777 = vmatpush1.msra.mxu0 %v739
    %778 = vmatprep.subr.mxu0 0.0
    %779 = vmatpush1.msra.mxu0 %v738
    %780 = vmatprep.subr.mxu0 0.0
    %781 = vmatpush1.msra.mxu0 %v737
    %782 = vmatprep.subr.mxu0 0.0
    %783 = vmatpush1.msra.mxu0 %v736
    %784 = vmatprep.subr.mxu0 0.0
    %785 = vmatpush2.msra.mxu0 0.0
    %786 = vmatprep.subr.mxu0 0.0
    %787 = vmatpush2.msra.mxu0 0.0
    %788 = vmatprep.subr.mxu0 0.0
    %789 = vmatpush2.msra.mxu0 0.0
    %790 = vmatprep.subr.mxu0 0.0
    %791 = vmatpush2.msra.mxu0 0.0
    %792 = vmatprep.subr.mxu0 0.0
    %793 = vmatpush2.msra.mxu0 0.0
    %794 = vmatprep.subr.mxu0 0.0
    %795 = vmatpush2.msra.mxu0 0.0
    %796 = vmatprep.subr.mxu0 0.0
    %797 = vmatpush2.msra.mxu0 0.0
    %798 = vmatprep.subr.mxu0 0.0
    %799 = vmatpush2.msra.mxu0 0.0
    %800 = vmatprep.subr.mxu0 0.0
    %801 = vmatpush2.msra.mxu0 0.0
    %802 = vmatprep.subr.mxu0 0.0
    %803 = vmatpush2.msra.mxu0 0.0
    %804 = vmatprep.subr.mxu0 0.0
    %805 = vmatpush2.msra.mxu0 0.0
    %806 = vmatprep.subr.mxu0 0.0
    %807 = vmatpush2.msra.mxu0 0.0
    %808 = vmatprep.subr.mxu0 0.0
    %809 = vmatpush2.msra.mxu0 0.0
    %810 = vmatprep.subr.mxu0 0.0
    %811 = vmatpush2.msra.mxu0 0.0
    %812 = vmatprep.subr.mxu0 0.0
    %813 = vmatpush2.msra.mxu0 0.0
    %814 = vmatprep.subr.mxu0 0.0
    %815 = vmatpush2.msra.mxu0 0.0
    %816 = vmatprep.mubr.f32.mxu0 0.0
    %817 = vmatmul.mubr.f32.gmra.mxu0 %v672
    %v818 = vpop.f32.mrf.mxu0
    %v819 = vadd.f32 0.0, %v818
    %v820 = vpop.f32.mrf.mxu0
    %821 = vmatprep.mubr.f32.mxu0 0.0
    %822 = vmatmul.mubr.f32.gmra.mxu0 %v673
    %v823 = vpop.f32.mrf.mxu0
    %v824 = vadd.f32 0.0, %v823
    %v825 = vpop.f32.mrf.mxu0
    %826 = vmatprep.mubr.f32.mxu0 0.0
    %827 = vmatmul.mubr.f32.gmra.mxu0 %v674
    %v828 = vpop.f32.mrf.mxu0
    %v829 = vadd.f32 0.0, %v828
    %v830 = vpop.f32.mrf.mxu0
    %831 = vmatprep.mubr.f32.mxu0 0.0
    %832 = vmatmul.mubr.f32.gmra.mxu0 %v675
    %v833 = vpop.f32.mrf.mxu0
    %v834 = vadd.f32 0.0, %v833
    %v835 = vpop.f32.mrf.mxu0
    %836 = vmatprep.mubr.f32.mxu0 0.0
    %837 = vmatmul.mubr.f32.gmra.mxu0 %v676
    %v838 = vpop.f32.mrf.mxu0
    %v839 = vadd.f32 0.0, %v838
    %v840 = vpop.f32.mrf.mxu0
    %841 = vmatprep.mubr.f32.mxu0 0.0
    %842 = vmatmul.mubr.f32.gmra.mxu0 %v677
    %v843 = vpop.f32.mrf.mxu0
    %v844 = vadd.f32 0.0, %v843
    %v845 = vpop.f32.mrf.mxu0
    %846 = vmatprep.mubr.f32.mxu0 0.0
    %847 = vmatmul.mubr.f32.gmra.mxu0 %v678
    %v848 = vpop.f32.mrf.mxu0
    %v849 = vadd.f32 0.0, %v848
    %v850 = vpop.f32.mrf.mxu0
    %851 = vmatprep.mubr.f32.mxu0 0.0
    %852 = vmatmul.mubr.f32.gmra.mxu0 %v679
    %v853 = vpop.f32.mrf.mxu0
    %v854 = vadd.f32 0.0, %v853
    %v855 = vpop.f32.mrf.mxu0
    %856 = vmatprep.mubr.f32.mxu0 0.0
    %857 = vmatmul.mubr.f32.gmra.mxu0 %v680
    %v858 = vpop.f32.mrf.mxu0
    %v859 = vadd.f32 0.0, %v858
    %v860 = vpop.f32.mrf.mxu0
    %861 = vmatprep.mubr.f32.mxu0 0.0
    %862 = vmatmul.mubr.f32.gmra.mxu0 %v681
    %v863 = vpop.f32.mrf.mxu0
    %v864 = vadd.f32 0.0, %v863
    %v865 = vpop.f32.mrf.mxu0
    %866 = vmatprep.mubr.f32.mxu0 0.0
    %867 = vmatmul.mubr.f32.gmra.mxu0 %v682
    %v868 = vpop.f32.mrf.mxu0
    %v869 = vadd.f32 0.0, %v868
    %v870 = vpop.f32.mrf.mxu0
    %871 = vmatprep.mubr.f32.mxu0 0.0
    %872 = vmatmul.mubr.f32.gmra.mxu0 %v683
    %v873 = vpop.f32.mrf.mxu0
    %v874 = vadd.f32 0.0, %v873
    %v875 = vpop.f32.mrf.mxu0
    %876 = vmatprep.mubr.f32.mxu0 0.0
    %877 = vmatmul.mubr.f32.gmra.mxu0 %v684
    %v878 = vpop.f32.mrf.mxu0
    %v879 = vadd.f32 0.0, %v878
    %v880 = vpop.f32.mrf.mxu0
    %881 = vmatprep.mubr.f32.mxu0 0.0
    %882 = vmatmul.mubr.f32.gmra.mxu0 %v685
    %v883 = vpop.f32.mrf.mxu0
    %v884 = vadd.f32 0.0, %v883
    %v885 = vpop.f32.mrf.mxu0
    %886 = vmatprep.mubr.f32.mxu0 0.0
    %887 = vmatmul.mubr.f32.gmra.mxu0 %v686
    %v888 = vpop.f32.mrf.mxu0
    %v889 = vadd.f32 0.0, %v888
    %v890 = vpop.f32.mrf.mxu0
    %891 = vmatprep.mubr.f32.mxu0 0.0
    %892 = vmatmul.mubr.f32.gmra.mxu0 %v687
    %v893 = vpop.f32.mrf.mxu0
    %v894 = vadd.f32 0.0, %v893
    %v895 = vpop.f32.mrf.mxu0
    %896 = vmatprep.mubr.f32.mxu0 0.0
    %897 = vmatmul.mubr.f32.gmra.mxu0 %v688
    %v898 = vpop.f32.mrf.mxu0
    %v899 = vadd.f32 0.0, %v898
    %v900 = vpop.f32.mrf.mxu0
    %901 = vmatprep.mubr.f32.mxu0 0.0
    %902 = vmatmul.mubr.f32.gmra.mxu0 %v689
    %v903 = vpop.f32.mrf.mxu0
    %v904 = vadd.f32 0.0, %v903
    %v905 = vpop.f32.mrf.mxu0
    %906 = vmatprep.mubr.f32.mxu0 0.0
    %907 = vmatmul.mubr.f32.gmra.mxu0 %v690
    %v908 = vpop.f32.mrf.mxu0
    %v909 = vadd.f32 0.0, %v908
    %v910 = vpop.f32.mrf.mxu0
    %911 = vmatprep.mubr.f32.mxu0 0.0
    %912 = vmatmul.mubr.f32.gmra.mxu0 %v691
    %v913 = vpop.f32.mrf.mxu0
    %v914 = vadd.f32 0.0, %v913
    %v915 = vpop.f32.mrf.mxu0
    %916 = vmatprep.mubr.f32.mxu0 0.0
    %917 = vmatmul.mubr.f32.gmra.mxu0 %v692
    %v918 = vpop.f32.mrf.mxu0
    %v919 = vadd.f32 0.0, %v918
    %v920 = vpop.f32.mrf.mxu0
    %921 = vmatprep.mubr.f32.mxu0 0.0
    %922 = vmatmul.mubr.f32.gmra.mxu0 %v693
    %v923 = vpop.f32.mrf.mxu0
    %v924 = vadd.f32 0.0, %v923
    %v925 = vpop.f32.mrf.mxu0
    %926 = vmatprep.mubr.f32.mxu0 0.0
    %927 = vmatmul.mubr.f32.gmra.mxu0 %v694
    %v928 = vpop.f32.mrf.mxu0
    %v929 = vadd.f32 0.0, %v928
    %v930 = vpop.f32.mrf.mxu0
    %931 = vmatprep.mubr.f32.mxu0 0.0
    %932 = vmatmul.mubr.f32.gmra.mxu0 %v695
    %v933 = vpop.f32.mrf.mxu0
    %v934 = vadd.f32 0.0, %v933
    %v935 = vpop.f32.mrf.mxu0
    %936 = vmatprep.mubr.f32.mxu0 0.0
    %937 = vmatmul.mubr.f32.gmra.mxu0 %v696
    %v938 = vpop.f32.mrf.mxu0
    %v939 = vadd.f32 0.0, %v938
    %v940 = vpop.f32.mrf.mxu0
    %941 = vmatprep.mubr.f32.mxu0 0.0
    %942 = vmatmul.mubr.f32.gmra.mxu0 %v697
    %v943 = vpop.f32.mrf.mxu0
    %v944 = vadd.f32 0.0, %v943
    %v945 = vpop.f32.mrf.mxu0
    %946 = vmatprep.mubr.f32.mxu0 0.0
    %947 = vmatmul.mubr.f32.gmra.mxu0 %v698
    %v948 = vpop.f32.mrf.mxu0
    %v949 = vadd.f32 0.0, %v948
    %v950 = vpop.f32.mrf.mxu0
    %951 = vmatprep.mubr.f32.mxu0 0.0
    %952 = vmatmul.mubr.f32.gmra.mxu0 %v699
    %v953 = vpop.f32.mrf.mxu0
    %v954 = vadd.f32 0.0, %v953
    %v955 = vpop.f32.mrf.mxu0
    %956 = vmatprep.mubr.f32.mxu0 0.0
    %957 = vmatmul.mubr.f32.gmra.mxu0 %v700
    %v958 = vpop.f32.mrf.mxu0
    %v959 = vadd.f32 0.0, %v958
    %v960 = vpop.f32.mrf.mxu0
    %961 = vmatprep.mubr.f32.mxu0 0.0
    %962 = vmatmul.mubr.f32.gmra.mxu0 %v701
    %v963 = vpop.f32.mrf.mxu0
    %v964 = vadd.f32 0.0, %v963
    %v965 = vpop.f32.mrf.mxu0
    %966 = vmatprep.mubr.f32.mxu0 0.0
    %967 = vmatmul.mubr.f32.gmra.mxu0 %v702
    %v968 = vpop.f32.mrf.mxu0
    %v969 = vadd.f32 0.0, %v968
    %v970 = vpop.f32.mrf.mxu0
    %971 = vmatprep.mubr.f32.mxu0 0.0
    %972 = vmatmul.mubr.f32.gmra.mxu0 %v703
    %v973 = vpop.f32.mrf.mxu0
    %v974 = vadd.f32 0.0, %v973
    %v975 = vpop.f32.mrf.mxu0
    %976 = vmatprep.mubr.f32.mxu0 0.0
    %977 = vmatmul.mubr.f32.gmra.mxu0 %v704
    %v978 = vpop.f32.mrf.mxu0
    %v979 = vadd.f32 0.0, %v978
    %v980 = vpop.f32.mrf.mxu0
    %981 = vmatprep.mubr.f32.mxu0 0.0
    %982 = vmatmul.mubr.f32.gmra.mxu0 %v705
    %v983 = vpop.f32.mrf.mxu0
    %v984 = vadd.f32 0.0, %v983
    %v985 = vpop.f32.mrf.mxu0
    %986 = vmatprep.mubr.f32.mxu0 0.0
    %987 = vmatmul.mubr.f32.gmra.mxu0 %v706
    %v988 = vpop.f32.mrf.mxu0
    %v989 = vadd.f32 0.0, %v988
    %v990 = vpop.f32.mrf.mxu0
    %991 = vmatprep.mubr.f32.mxu0 0.0
    %992 = vmatmul.mubr.f32.gmra.mxu0 %v707
    %v993 = vpop.f32.mrf.mxu0
    %v994 = vadd.f32 0.0, %v993
    %v995 = vpop.f32.mrf.mxu0
    %996 = vmatprep.mubr.f32.mxu0 0.0
    %997 = vmatmul.mubr.f32.gmra.mxu0 %v708
    %v998 = vpop.f32.mrf.mxu0
    %v999 = vadd.f32 0.0, %v998
    %v1000 = vpop.f32.mrf.mxu0
    %1001 = vmatprep.mubr.f32.mxu0 0.0
    %1002 = vmatmul.mubr.f32.gmra.mxu0 %v709
    %v1003 = vpop.f32.mrf.mxu0
    %v1004 = vadd.f32 0.0, %v1003
    %v1005 = vpop.f32.mrf.mxu0
    %1006 = vmatprep.mubr.f32.mxu0 0.0
    %1007 = vmatmul.mubr.f32.gmra.mxu0 %v710
    %v1008 = vpop.f32.mrf.mxu0
    %v1009 = vadd.f32 0.0, %v1008
    %v1010 = vpop.f32.mrf.mxu0
    %1011 = vmatprep.mubr.f32.mxu0 0.0
    %1012 = vmatmul.mubr.f32.gmra.mxu0 %v711
    %v1013 = vpop.f32.mrf.mxu0
    %v1014 = vadd.f32 0.0, %v1013
    %v1015 = vpop.f32.mrf.mxu0
    %1016 = vmatprep.mubr.f32.mxu0 0.0
    %1017 = vmatmul.mubr.f32.gmra.mxu0 %v712
    %v1018 = vpop.f32.mrf.mxu0
    %v1019 = vadd.f32 0.0, %v1018
    %v1020 = vpop.f32.mrf.mxu0
    %1021 = vmatprep.mubr.f32.mxu0 0.0
    %1022 = vmatmul.mubr.f32.gmra.mxu0 %v713
    %v1023 = vpop.f32.mrf.mxu0
    %v1024 = vadd.f32 0.0, %v1023
    %v1025 = vpop.f32.mrf.mxu0
    %1026 = vmatprep.mubr.f32.mxu0 0.0
    %1027 = vmatmul.mubr.f32.gmra.mxu0 %v714
    %v1028 = vpop.f32.mrf.mxu0
    %v1029 = vadd.f32 0.0, %v1028
    %v1030 = vpop.f32.mrf.mxu0
    %1031 = vmatprep.mubr.f32.mxu0 0.0
    %1032 = vmatmul.mubr.f32.gmra.mxu0 %v715
    %v1033 = vpop.f32.mrf.mxu0
    %v1034 = vadd.f32 0.0, %v1033
    %v1035 = vpop.f32.mrf.mxu0
    %1036 = vmatprep.mubr.f32.mxu0 0.0
    %1037 = vmatmul.mubr.f32.gmra.mxu0 %v716
    %v1038 = vpop.f32.mrf.mxu0
    %v1039 = vadd.f32 0.0, %v1038
    %v1040 = vpop.f32.mrf.mxu0
    %1041 = vmatprep.mubr.f32.mxu0 0.0
    %1042 = vmatmul.mubr.f32.gmra.mxu0 %v717
    %v1043 = vpop.f32.mrf.mxu0
    %v1044 = vadd.f32 0.0, %v1043
    %v1045 = vpop.f32.mrf.mxu0
    %1046 = vmatprep.mubr.f32.mxu0 0.0
    %1047 = vmatmul.mubr.f32.gmra.mxu0 %v718
    %v1048 = vpop.f32.mrf.mxu0
    %v1049 = vadd.f32 0.0, %v1048
    %v1050 = vpop.f32.mrf.mxu0
    %1051 = vmatprep.mubr.f32.mxu0 0.0
    %1052 = vmatmul.mubr.f32.gmra.mxu0 %v719
    %v1053 = vpop.f32.mrf.mxu0
    %v1054 = vadd.f32 0.0, %v1053
    %v1055 = vpop.f32.mrf.mxu0
    %1056 = vmatprep.mubr.f32.mxu0 0.0
    %1057 = vmatmul.mubr.f32.gmra.mxu0 %v720
    %v1058 = vpop.f32.mrf.mxu0
    %v1059 = vadd.f32 0.0, %v1058
    %v1060 = vpop.f32.mrf.mxu0
    %1061 = vmatprep.mubr.f32.mxu0 0.0
    %1062 = vmatmul.mubr.f32.gmra.mxu0 %v721
    %v1063 = vpop.f32.mrf.mxu0
    %v1064 = vadd.f32 0.0, %v1063
    %v1065 = vpop.f32.mrf.mxu0
    %1066 = vmatprep.mubr.f32.mxu0 0.0
    %1067 = vmatmul.mubr.f32.gmra.mxu0 %v722
    %v1068 = vpop.f32.mrf.mxu0
    %v1069 = vadd.f32 0.0, %v1068
    %v1070 = vpop.f32.mrf.mxu0
    %1071 = vmatprep.mubr.f32.mxu0 0.0
    %1072 = vmatmul.mubr.f32.gmra.mxu0 %v723
    %v1073 = vpop.f32.mrf.mxu0
    %v1074 = vadd.f32 0.0, %v1073
    %v1075 = vpop.f32.mrf.mxu0
    %1076 = vmatprep.mubr.f32.mxu0 0.0
    %1077 = vmatmul.mubr.f32.gmra.mxu0 %v724
    %v1078 = vpop.f32.mrf.mxu0
    %v1079 = vadd.f32 0.0, %v1078
    %v1080 = vpop.f32.mrf.mxu0
    %1081 = vmatprep.mubr.f32.mxu0 0.0
    %1082 = vmatmul.mubr.f32.gmra.mxu0 %v725
    %v1083 = vpop.f32.mrf.mxu0
    %v1084 = vadd.f32 0.0, %v1083
    %v1085 = vpop.f32.mrf.mxu0
    %1086 = vmatprep.mubr.f32.mxu0 0.0
    %1087 = vmatmul.mubr.f32.gmra.mxu0 %v726
    %v1088 = vpop.f32.mrf.mxu0
    %v1089 = vadd.f32 0.0, %v1088
    %v1090 = vpop.f32.mrf.mxu0
    %1091 = vmatprep.mubr.f32.mxu0 0.0
    %1092 = vmatmul.mubr.f32.gmra.mxu0 %v727
    %v1093 = vpop.f32.mrf.mxu0
    %v1094 = vadd.f32 0.0, %v1093
    %v1095 = vpop.f32.mrf.mxu0
    %1096 = vmatprep.mubr.f32.mxu0 0.0
    %1097 = vmatmul.mubr.f32.gmra.mxu0 %v728
    %v1098 = vpop.f32.mrf.mxu0
    %v1099 = vadd.f32 0.0, %v1098
    %v1100 = vpop.f32.mrf.mxu0
    %1101 = vmatprep.mubr.f32.mxu0 0.0
    %1102 = vmatmul.mubr.f32.gmra.mxu0 %v729
    %v1103 = vpop.f32.mrf.mxu0
    %v1104 = vadd.f32 0.0, %v1103
    %v1105 = vpop.f32.mrf.mxu0
    %1106 = vmatprep.mubr.f32.mxu0 0.0
    %1107 = vmatmul.mubr.f32.gmra.mxu0 %v730
    %v1108 = vpop.f32.mrf.mxu0
    %v1109 = vadd.f32 0.0, %v1108
    %v1110 = vpop.f32.mrf.mxu0
    %1111 = vmatprep.mubr.f32.mxu0 0.0
    %1112 = vmatmul.mubr.f32.gmra.mxu0 %v731
    %v1113 = vpop.f32.mrf.mxu0
    %v1114 = vadd.f32 0.0, %v1113
    %v1115 = vpop.f32.mrf.mxu0
    %1116 = vmatprep.mubr.f32.mxu0 0.0
    %1117 = vmatmul.mubr.f32.gmra.mxu0 %v732
    %v1118 = vpop.f32.mrf.mxu0
    %v1119 = vadd.f32 0.0, %v1118
    %v1120 = vpop.f32.mrf.mxu0
    %1121 = vmatprep.mubr.f32.mxu0 0.0
    %1122 = vmatmul.mubr.f32.gmra.mxu0 %v733
    %v1123 = vpop.f32.mrf.mxu0
    %v1124 = vadd.f32 0.0, %v1123
    %v1125 = vpop.f32.mrf.mxu0
    %1126 = vmatprep.mubr.f32.mxu0 0.0
    %1127 = vmatmul.mubr.f32.gmra.mxu0 %v734
    %v1128 = vpop.f32.mrf.mxu0
    %v1129 = vadd.f32 0.0, %v1128
    %v1130 = vpop.f32.mrf.mxu0
    %1131 = vmatprep.mubr.f32.mxu0 0.0
    %1132 = vmatmul.mubr.f32.gmra.mxu0 %v735
    %v1133 = vpop.f32.mrf.mxu0
    %v1134 = vadd.f32 0.0, %v1133
    %v1135 = vpop.f32.mrf.mxu0
    %1136 = vdwg.mxu0
    %vm1137 = vcmask 523264
    %1138 = vst.msk [vmem:[#allocation2] sm:$0xff] %vm1137, %v819
    %1139 = vst.msk [vmem:[#allocation2 + $0x8] sm:$0xff] %vm1137, %v824
    %1140 = vst.msk [vmem:[#allocation2 + $0x10] sm:$0xff] %vm1137, %v829
    %1141 = vst.msk [vmem:[#allocation2 + $0x18] sm:$0xff] %vm1137, %v834
    %1142 = vst.msk [vmem:[#allocation2 + $0x20] sm:$0xff] %vm1137, %v839
    %1143 = vst.msk [vmem:[#allocation2 + $0x28] sm:$0xff] %vm1137, %v844
    %1144 = vst.msk [vmem:[#allocation2 + $0x30] sm:$0xff] %vm1137, %v849
    %1145 = vst.msk [vmem:[#allocation2 + $0x38] sm:$0xff] %vm1137, %v854
    %1146 = vst.msk [vmem:[#allocation2 + $0x40] sm:$0xff] %vm1137, %v859
    %1147 = vst.msk [vmem:[#allocation2 + $0x48] sm:$0xff] %vm1137, %v864
    %1148 = vst.msk [vmem:[#allocation2 + $0x50] sm:$0xff] %vm1137, %v869
    %1149 = vst.msk [vmem:[#allocation2 + $0x58] sm:$0xff] %vm1137, %v874
    %1150 = vst.msk [vmem:[#allocation2 + $0x60] sm:$0xff] %vm1137, %v879
    %1151 = vst.msk [vmem:[#allocation2 + $0x68] sm:$0xff] %vm1137, %v884
    %1152 = vst.msk [vmem:[#allocation2 + $0x70] sm:$0xff] %vm1137, %v889
    %1153 = vst.msk [vmem:[#allocation2 + $0x78] sm:$0xff] %vm1137, %v894
    %1154 = vst.msk [vmem:[#allocation2 + $0x80] sm:$0xff] %vm1137, %v899
    %1155 = vst.msk [vmem:[#allocation2 + $0x88] sm:$0xff] %vm1137, %v904
    %1156 = vst.msk [vmem:[#allocation2 + $0x90] sm:$0xff] %vm1137, %v909
    %1157 = vst.msk [vmem:[#allocation2 + $0x98] sm:$0xff] %vm1137, %v914
    %1158 = vst.msk [vmem:[#allocation2 + $0xa0] sm:$0xff] %vm1137, %v919
    %1159 = vst.msk [vmem:[#allocation2 + $0xa8] sm:$0xff] %vm1137, %v924
    %1160 = vst.msk [vmem:[#allocation2 + $0xb0] sm:$0xff] %vm1137, %v929
    %1161 = vst.msk [vmem:[#allocation2 + $0xb8] sm:$0xff] %vm1137, %v934
    %1162 = vst.msk [vmem:[#allocation2 + $0xc0] sm:$0xff] %vm1137, %v939
    %1163 = vst.msk [vmem:[#allocation2 + $0xc8] sm:$0xff] %vm1137, %v944
    %1164 = vst.msk [vmem:[#allocation2 + $0xd0] sm:$0xff] %vm1137, %v949
    %1165 = vst.msk [vmem:[#allocation2 + $0xd8] sm:$0xff] %vm1137, %v954
    %1166 = vst.msk [vmem:[#allocation2 + $0xe0] sm:$0xff] %vm1137, %v959
    %1167 = vst.msk [vmem:[#allocation2 + $0xe8] sm:$0xff] %vm1137, %v964
    %1168 = vst.msk [vmem:[#allocation2 + $0xf0] sm:$0xff] %vm1137, %v969
    %1169 = vst.msk [vmem:[#allocation2 + $0xf8] sm:$0xff] %vm1137, %v974
    %1170 = vst.msk [vmem:[#allocation2 + $0x100] sm:$0xff] %vm1137, %v979
    %1171 = vst.msk [vmem:[#allocation2 + $0x108] sm:$0xff] %vm1137, %v984
    %1172 = vst.msk [vmem:[#allocation2 + $0x110] sm:$0xff] %vm1137, %v989
    %1173 = vst.msk [vmem:[#allocation2 + $0x118] sm:$0xff] %vm1137, %v994
    %1174 = vst.msk [vmem:[#allocation2 + $0x120] sm:$0xff] %vm1137, %v999
    %1175 = vst.msk [vmem:[#allocation2 + $0x128] sm:$0xff] %vm1137, %v1004
    %1176 = vst.msk [vmem:[#allocation2 + $0x130] sm:$0xff] %vm1137, %v1009
    %1177 = vst.msk [vmem:[#allocation2 + $0x138] sm:$0xff] %vm1137, %v1014
    %1178 = vst.msk [vmem:[#allocation2 + $0x140] sm:$0xff] %vm1137, %v1019
    %1179 = vst.msk [vmem:[#allocation2 + $0x148] sm:$0xff] %vm1137, %v1024
    %1180 = vst.msk [vmem:[#allocation2 + $0x150] sm:$0xff] %vm1137, %v1029
    %1181 = vst.msk [vmem:[#allocation2 + $0x158] sm:$0xff] %vm1137, %v1034
    %1182 = vst.msk [vmem:[#allocation2 + $0x160] sm:$0xff] %vm1137, %v1039
    %1183 = vst.msk [vmem:[#allocation2 + $0x168] sm:$0xff] %vm1137, %v1044
    %1184 = vst.msk [vmem:[#allocation2 + $0x170] sm:$0xff] %vm1137, %v1049
    %1185 = vst.msk [vmem:[#allocation2 + $0x178] sm:$0xff] %vm1137, %v1054
    %1186 = vst.msk [vmem:[#allocation2 + $0x180] sm:$0xff] %vm1137, %v1059
    %1187 = vst.msk [vmem:[#allocation2 + $0x188] sm:$0xff] %vm1137, %v1064
    %1188 = vst.msk [vmem:[#allocation2 + $0x190] sm:$0xff] %vm1137, %v1069
    %1189 = vst.msk [vmem:[#allocation2 + $0x198] sm:$0xff] %vm1137, %v1074
    %1190 = vst.msk [vmem:[#allocation2 + $0x1a0] sm:$0xff] %vm1137, %v1079
    %1191 = vst.msk [vmem:[#allocation2 + $0x1a8] sm:$0xff] %vm1137, %v1084
    %1192 = vst.msk [vmem:[#allocation2 + $0x1b0] sm:$0xff] %vm1137, %v1089
    %1193 = vst.msk [vmem:[#allocation2 + $0x1b8] sm:$0xff] %vm1137, %v1094
    %1194 = vst.msk [vmem:[#allocation2 + $0x1c0] sm:$0xff] %vm1137, %v1099
    %1195 = vst.msk [vmem:[#allocation2 + $0x1c8] sm:$0xff] %vm1137, %v1104
    %1196 = vst.msk [vmem:[#allocation2 + $0x1d0] sm:$0xff] %vm1137, %v1109
    %1197 = vst.msk [vmem:[#allocation2 + $0x1d8] sm:$0xff] %vm1137, %v1114
    %1198 = vst.msk [vmem:[#allocation2 + $0x1e0] sm:$0xff] %vm1137, %v1119
    %1199 = vst.msk [vmem:[#allocation2 + $0x1e8] sm:$0xff] %vm1137, %v1124
    %1200 = vst.msk [vmem:[#allocation2 + $0x1f0] sm:$0xff] %vm1137, %v1129
    %1201 = vst.msk [vmem:[#allocation2 + $0x1f8] sm:$0xff] %vm1137, %v1134
    // Predicated region
    $region18: #{tpu_custom_call.1} parent=1 // pred_check
      _
    $region19: #{tpu_custom_call.1} parent=1 // pred_check_branch
      %1203 = sbr.rel (0) target = $region21
    $region20: #{tpu_custom_call.1} parent=1 // pred_region
      %s1205 = ssub.s32 8192, 8192
      %1206 = vsyncadd [#allocation3], %s1205
      %s1207 = sshll.u32 [#allocation2], 4
      %s1208 = int_to_ptr.vmem [resolvable:$true] %s1207
      %1213 = dma.vmem_to_hbm [thread:$0]  %s1208, 8192, %s4, [#allocation3], 128, 128, 8
    $region21: #{tpu_custom_call.1} parent=1 // pred_fallthru
      _
    // Predicated region
    $region22: #{tpu_custom_call.1} parent=1 // pred_check
      _
    $region23: #{tpu_custom_call.1} parent=1 // pred_check_branch
      %1215 = sbr.rel (0) target = $region25
    $region24: #{tpu_custom_call.1} parent=1 // pred_region
      %1216 = dma.done [#allocation3], 8192
    $region25: #{tpu_custom_call.1} parent=1 // pred_fallthru
      _
    %1217 = vsyncpa [#allocation3], 1

</llo_original>
